<compile_context>
chip_gen: v6e
topology: v6e:2x2x1
jax: 0.10.0
libtpu: 0.0.40
codegen_flags: <defaults>
</compile_context>

<pallas_src>
import functools

import jax
import jax.numpy as jnp
from jax import lax
from jax.experimental import pallas as pl
from jax.experimental.pallas import tpu as pltpu


def _gcl_kernel(
    x_ref,      # (B, Cin, N)   f32, NCL
    fwA_ref,    # (B, N, N)     f32
    bwA_ref,    # (B, N, N)     f32
    w1_ref,     # (B, 3S, Cin)  bf16: rows [0:S]=cscale*Wc, [S:2S]=Wf^T, [2S:3S]=Wb^T
    w2_ref,     # (Cin, 3S)     bf16, nscale folded into rows
    vecs_ref,   # (R, 2)        f32: col0=[cshift; bf; bb], col1[0:Cin]=nshift
    out_ref,    # (Cin, B*N)    f32, lane-dense output slab
    upd_ref,    # (3S, N)       bf16 VMEM scratch (replaces jnp.concatenate)
    *, batch, s, cin, n,
):
    w2 = w2_ref[...]                       # (Cin, 3S) bf16
    vecs = vecs_ref[...]                   # (R, 2)    f32
    cshift = vecs[0:s, 0:1]                # (S, 1)  BN(condense) shift (+conv bias)
    bf_b = vecs[s:2 * s, 0:1]              # (S, 1)  forward-GCN bias
    bb_b = vecs[2 * s:3 * s, 0:1]          # (S, 1)  backward-GCN bias
    nshift = vecs[0:cin, 1:2]              # (Cin, 1) final BN shift

    # contract last dims: result[c, i] = sum_j sup[c, j] * adj[i, j] == (adj @ sup^T)^T
    dn = (((1,), (1,)), ((), ()))

    for b in range(batch):                 # static unroll; B is tiny
        x = x_ref[b]                                   # (Cin, N) f32 (residual stays f32)
        x_bf = x.astype(jnp.bfloat16)
        fwA = fwA_ref[b].astype(jnp.bfloat16)          # (N, N)
        bwA = bwA_ref[b].astype(jnp.bfloat16)          # (N, N)

        # single merged weight dot: condense + both GCN supports -> (3S, N) f32
        xw = jnp.dot(w1_ref[b], x_bf, preferred_element_type=jnp.float32)

        # condensed_message = relu(BN(conv1x1(x))); scale folded into W, bias into cshift
        upd_ref[0:s, :] = jnp.maximum(xw[0:s] + cshift, 0.0).astype(jnp.bfloat16)

        # fw/bw GCN messages (transposed form): (adj @ support)^T = support^T @ adj^T
        fw = lax.dot_general(xw[s:2 * s].astype(jnp.bfloat16), fwA, dn,
                             preferred_element_type=jnp.float32) + bf_b
        upd_ref[s:2 * s, :] = jnp.maximum(fw, 0.0).astype(jnp.bfloat16)

        bw = lax.dot_general(xw[2 * s:3 * s].astype(jnp.bfloat16), bwA, dn,
                             preferred_element_type=jnp.float32) + bb_b
        upd_ref[2 * s:3 * s, :] = jnp.maximum(bw, 0.0).astype(jnp.bfloat16)

        # final 1x1 conv over the concatenated update, straight from the VMEM scratch
        y = jnp.dot(w2, upd_ref[...], preferred_element_type=jnp.float32)   # (Cin, N)

        # eval-BN shift (scale already in w2) + residual + relu, all f32;
        # batch b lands in lanes [b*N, (b+1)*N) of the lane-dense output slab.
        out_ref[:, b * n:(b + 1) * n] = jnp.maximum(y + nshift + x, 0.0)


def prepare_params(params, eps=1e-5):
    """One-time weight prep (outside the per-call path): BN folds, scale folds,
    transposes, concats, per-channel-vector packing and bf16 casts."""
    S, Cin, _ = params["condense_w"].shape
    B = params["gcn_fw_w"].shape[0]

    cscale = params["cn_gamma"] / jnp.sqrt(params["cn_var"] + eps)
    cshift = params["cn_beta"] - params["cn_mean"] * cscale
    cshift = cshift + cscale * params["condense_b"]      # fold conv bias into BN shift
    nscale = params["n_gamma"] / jnp.sqrt(params["n_var"] + eps)
    nshift = params["n_beta"] - params["n_mean"] * nscale

    # cscale folded into the condense weight rows; broadcast over batch and merge
    # with the per-batch GCN weights (transposed) into one (B, 3S, Cin) operand.
    wc_scaled = cscale[:, None] * params["condense_w"][:, :, 0]        # (S, Cin)
    wf_t = jnp.transpose(params["gcn_fw_w"], (0, 2, 1))                # (B, S, Cin)
    wb_t = jnp.transpose(params["gcn_bw_w"], (0, 2, 1))                # (B, S, Cin)
    w1 = jnp.concatenate(
        [jnp.broadcast_to(wc_scaled[None], (B, S, Cin)), wf_t, wb_t], axis=1
    ).astype(jnp.bfloat16)                                             # (B, 3S, Cin)

    # nscale folded into the final conv weight rows.
    w2 = (nscale[:, None] * params["conv1d_w"][:, :, 0]).astype(jnp.bfloat16)  # (Cin, 3S)

    # All remaining per-channel vectors packed into ONE small f32 array (one DMA):
    # col0 = [cshift; bf; bb]  (length 3S), col1[0:Cin] = nshift.
    rows = max(3 * S, Cin)
    col0 = jnp.zeros((rows,), jnp.float32).at[: 3 * S].set(
        jnp.concatenate([cshift, params["gcn_fw_b"], params["gcn_bw_b"]]).astype(jnp.float32))
    col1 = jnp.zeros((rows,), jnp.float32).at[:Cin].set(nshift.astype(jnp.float32))
    vecs = jnp.stack([col0, col1], axis=1)                             # (rows, 2)

    return {"w1": w1, "w2": w2, "vecs": vecs}


@jax.jit
def graph_convolution_layer(x, fw_A, bw_A, prep):
    """x: (B, in_size, N) NCL like PyTorch; fw_A/bw_A: (B, N, N). Returns (B, in_size, N)."""
    B, Cin, N = x.shape
    S = prep["w1"].shape[1] // 3
    R = prep["vecs"].shape[0]

    kernel = functools.partial(_gcl_kernel, batch=B, s=S, cin=Cin, n=N)
    z3 = lambda i: (0, 0, 0)
    z2 = lambda i: (0, 0)

    out = pl.pallas_call(
        kernel,
        out_shape=jax.ShapeDtypeStruct((Cin, B * N), jnp.float32),   # lane-dense slab
        grid_spec=pltpu.PrefetchScalarGridSpec(
            num_scalar_prefetch=0,
            grid=(1,),                      # whole (tiny) problem in one step
            in_specs=[
                pl.BlockSpec((B, Cin, N), z3),        # x (NCL)
                pl.BlockSpec((B, N, N), z3),          # fw_A
                pl.BlockSpec((B, N, N), z3),          # bw_A
                pl.BlockSpec((B, 3 * S, Cin), z3),    # merged per-batch weight
                pl.BlockSpec((Cin, 3 * S), z2),       # final conv weight (nscale folded)
                pl.BlockSpec((R, 2), z2),             # packed per-channel vectors
            ],
            out_specs=pl.BlockSpec((Cin, B * N), z2),
            scratch_shapes=[pltpu.VMEM((3 * S, N), jnp.bfloat16)],    # update scratch
        ),
        compiler_params=pltpu.CompilerParams(
            dimension_semantics=("arbitrary",),
        ),
    )(x, fw_A, bw_A, prep["w1"], prep["w2"], prep["vecs"])

    # Layout plumbing only: (Cin, B*N) lane-dense slab -> (B, Cin, N) NCL output.
    return jnp.swapaxes(out.reshape(Cin, B, N), 0, 1)


def _reference(x, fw_A, bw_A, params, eps=1e-5):
    """Pure-jnp f32 reference with identical (eval-BN) semantics, NCL layout."""
    cond = jnp.einsum("sc,bcn->bsn", params["condense_w"][:, :, 0], x)
    cond = cond + params["condense_b"][None, :, None]
    cond = ((cond - params["cn_mean"][None, :, None])
            / jnp.sqrt(params["cn_var"][None, :, None] + eps)
            * params["cn_gamma"][None, :, None] + params["cn_beta"][None, :, None])
    cond = jnp.maximum(cond, 0.0)                                      # (B, S, N)

    x_nlc = jnp.transpose(x, (0, 2, 1))                                # (B, N, Cin)

    def gcn(adj, w, b):
        sup = jnp.einsum("bnc,bcs->bns", x_nlc, w)
        out = jnp.einsum("bnm,bms->bns", adj, sup) + b
        return jnp.maximum(jnp.transpose(out, (0, 2, 1)), 0.0)         # (B, S, N)

    fw = gcn(fw_A, params["gcn_fw_w"], params["gcn_fw_b"])
    bw = gcn(bw_A, params["gcn_bw_w"], params["gcn_bw_b"])

    update = jnp.concatenate([cond, fw, bw], axis=1)                   # (B, 3S, N)
    y = jnp.einsum("ck,bkn->bcn", params["conv1d_w"][:, :, 0], update)
    y = ((y - params["n_mean"][None, :, None])
         / jnp.sqrt(params["n_var"][None, :, None] + eps)
         * params["n_gamma"][None, :, None] + params["n_beta"][None, :, None])
    return jnp.maximum(y + x, 0.0)


def _init_params(key, B, in_size, state_size):
    ks = jax.random.split(key, 8)
    S, Cin = state_size, in_size

    # GraphConvolution per-batch weights: xavier_normal_ on shape (B, Cin, S), gain=0.02
    fan_in = Cin * S
    fan_out = B * S
    std = 0.02 * (2.0 / (fan_in + fan_out)) ** 0.5
    gcn_fw_w = std * jax.random.normal(ks[0], (B, Cin, S), jnp.float32)
    gcn_bw_w = std * jax.random.normal(ks[1], (B, Cin, S), jnp.float32)

    return {
        # condense = Conv1d(Cin, S, 1)
        "condense_w": 0.1 * jax.random.normal(ks[2], (S, Cin, 1), jnp.float32),
        "condense_b": 0.1 * jax.random.normal(ks[3], (S,), jnp.float32),
        # condense_norm = BatchNorm1d(S), default buffers (eval)
        "cn_gamma": jnp.ones((S,), jnp.float32),
        "cn_beta": jnp.zeros((S,), jnp.float32),
        "cn_mean": jnp.zeros((S,), jnp.float32),
        "cn_var": jnp.ones((S,), jnp.float32),
        # GCN forward / backward, bias init = 0 (reset_parameters_xavier)
        "gcn_fw_w": gcn_fw_w,
        "gcn_fw_b": jnp.zeros((S,), jnp.float32),
        "gcn_bw_w": gcn_bw_w,
        "gcn_bw_b": jnp.zeros((S,), jnp.float32),
        # conv1d = Conv1d(3S, Cin, 1, bias=False)
        "conv1d_w": 0.1 * jax.random.normal(ks[4], (Cin, 3 * S, 1), jnp.float32),
        # norm = BatchNorm1d(Cin)
        "n_gamma": jnp.ones((Cin,), jnp.float32),
        "n_beta": jnp.zeros((Cin,), jnp.float32),
        "n_mean": jnp.zeros((Cin,), jnp.float32),
        "n_var": jnp.ones((Cin,), jnp.float32),
    }


if __name__ == "__main__":
    B, in_size, state_size, N = 2, 32, 16, 64

    key = jax.random.PRNGKey(0)
    k_x, k_fw, k_bw, k_p = jax.random.split(key, 4)

    x = jax.random.normal(k_x, (B, in_size, N), jnp.float32)      # NCL, like PyTorch
    fw_A = jax.random.uniform(k_fw, (B, N, N), jnp.float32)
    fw_A = fw_A / jnp.sum(fw_A, axis=-1, keepdims=True)           # row-normalized adj
    bw_A = jnp.transpose(fw_A, (0, 2, 1))
    bw_A = bw_A / jnp.sum(bw_A, axis=-1, keepdims=True)

    params = _init_params(k_p, B, in_size, state_size)
    prep = prepare_params(params)                 # one-time prep, outside per-call path
    prep = jax.tree_util.tree_map(jnp.asarray, prep)

    out = graph_convolution_layer(x, fw_A, bw_A, prep)
    out = jax.block_until_ready(out)

    ref = jax.block_until_ready(_reference(x, fw_A, bw_A, params))
    assert out.shape == (B, in_size, N), out.shape
    max_err = float(jnp.max(jnp.abs(out - ref)))
    # bf16 MXU operands vs f32 reference -> loosened tolerance (documented).
    assert jnp.allclose(out, ref, atol=2e-2, rtol=2e-2), max_err

    print("KERNEL_OK")
</pallas_src>

<mosaic_0001>
module attributes {stable_mosaic.version = 11 : i64} {
  func.func @_gcl_kernel(%arg0: i32, %arg1: memref<2x32x64xf32, #tpu.memory_space<vmem>>, %arg2: memref<2x64x64xf32, #tpu.memory_space<vmem>>, %arg3: memref<2x64x64xf32, #tpu.memory_space<vmem>>, %arg4: memref<2x48x32xbf16, #tpu.memory_space<vmem>>, %arg5: memref<32x48xbf16, #tpu.memory_space<vmem>>, %arg6: memref<48x2xf32, #tpu.memory_space<vmem>>, %arg7: memref<32x128xf32, #tpu.memory_space<vmem>>, %arg8: memref<48x64xbf16, #tpu.memory_space<vmem>>) attributes {dimension_semantics = [#tpu.dimension_semantics<arbitrary>], iteration_bounds = array<i64: 1>, scalar_prefetch = 0 : i64, scratch_operands = 1 : i64, tpu.core_type = #tpu.core_type<tc>, window_params = [{pipeline_mode = #tpu.pipeline_mode<synchronous>, transform_indices = @transform_0, window_bounds = array<i64: 2, 32, 64>}, {pipeline_mode = #tpu.pipeline_mode<synchronous>, transform_indices = @transform_1, window_bounds = array<i64: 2, 64, 64>}, {pipeline_mode = #tpu.pipeline_mode<synchronous>, transform_indices = @transform_2, window_bounds = array<i64: 2, 64, 64>}, {pipeline_mode = #tpu.pipeline_mode<synchronous>, transform_indices = @transform_3, window_bounds = array<i64: 2, 48, 32>}, {pipeline_mode = #tpu.pipeline_mode<synchronous>, transform_indices = @transform_4, window_bounds = array<i64: 32, 48>}, {pipeline_mode = #tpu.pipeline_mode<synchronous>, transform_indices = @transform_5, window_bounds = array<i64: 48, 2>}, {pipeline_mode = #tpu.pipeline_mode<synchronous>, transform_indices = @transform_6, window_bounds = array<i64: 32, 128>}]} {
    %c0 = arith.constant 0 : index
    %c0_0 = arith.constant 0 : index
    %0 = vector.load %arg5[%c0, %c0_0] : memref<32x48xbf16, #tpu.memory_space<vmem>>, vector<32x48xbf16>
    %c0_1 = arith.constant 0 : index
    %c0_2 = arith.constant 0 : index
    %1 = vector.load %arg6[%c0_1, %c0_2] : memref<48x2xf32, #tpu.memory_space<vmem>>, vector<48x2xf32>
    %2 = vector.extract_strided_slice %1 {offsets = [0, 0], sizes = [16, 1], strides = [1, 1]} : vector<48x2xf32> to vector<16x1xf32>
    %3 = vector.extract_strided_slice %1 {offsets = [16, 0], sizes = [16, 1], strides = [1, 1]} : vector<48x2xf32> to vector<16x1xf32>
    %4 = vector.extract_strided_slice %1 {offsets = [32, 0], sizes = [16, 1], strides = [1, 1]} : vector<48x2xf32> to vector<16x1xf32>
    %5 = vector.extract_strided_slice %1 {offsets = [0, 1], sizes = [32, 1], strides = [1, 1]} : vector<48x2xf32> to vector<32x1xf32>
    %c0_3 = arith.constant 0 : index
    %c0_4 = arith.constant 0 : index
    %c0_5 = arith.constant 0 : index
    %6 = vector.load %arg1[%c0_3, %c0_4, %c0_5] : memref<2x32x64xf32, #tpu.memory_space<vmem>>, vector<1x32x64xf32>
    %7 = vector.shape_cast %6 : vector<1x32x64xf32> to vector<32x64xf32>
    %8 = arith.truncf %7 : vector<32x64xf32> to vector<32x64xbf16>
    %c0_6 = arith.constant 0 : index
    %c0_7 = arith.constant 0 : index
    %c0_8 = arith.constant 0 : index
    %9 = vector.load %arg2[%c0_6, %c0_7, %c0_8] : memref<2x64x64xf32, #tpu.memory_space<vmem>>, vector<1x64x64xf32>
    %10 = vector.shape_cast %9 : vector<1x64x64xf32> to vector<64x64xf32>
    %11 = arith.truncf %10 : vector<64x64xf32> to vector<64x64xbf16>
    %c0_9 = arith.constant 0 : index
    %c0_10 = arith.constant 0 : index
    %c0_11 = arith.constant 0 : index
    %12 = vector.load %arg3[%c0_9, %c0_10, %c0_11] : memref<2x64x64xf32, #tpu.memory_space<vmem>>, vector<1x64x64xf32>
    %13 = vector.shape_cast %12 : vector<1x64x64xf32> to vector<64x64xf32>
    %14 = arith.truncf %13 : vector<64x64xf32> to vector<64x64xbf16>
    %c0_12 = arith.constant 0 : index
    %c0_13 = arith.constant 0 : index
    %c0_14 = arith.constant 0 : index
    %15 = vector.load %arg4[%c0_12, %c0_13, %c0_14] : memref<2x48x32xbf16, #tpu.memory_space<vmem>>, vector<1x48x32xbf16>
    %16 = vector.shape_cast %15 : vector<1x48x32xbf16> to vector<48x32xbf16>
    %cst = arith.constant dense<0.000000e+00> : vector<48x64xf32>
    %17 = tpu.matmul %16, %8, %cst {dimension_numbers = #tpu.dot_dimension_numbers<[1], [0], [0], [1], [0, 0, 1, 1], [], []>} : vector<48x32xbf16>, vector<32x64xbf16>, vector<48x64xf32> -> vector<48x64xf32>
    %18 = vector.extract_strided_slice %17 {offsets = [0, 0], sizes = [16, 64], strides = [1, 1]} : vector<48x64xf32> to vector<16x64xf32>
    %19 = vector.broadcast %2 : vector<16x1xf32> to vector<16x64xf32>
    %20 = arith.addf %18, %19 : vector<16x64xf32>
    %cst_15 = arith.constant 0.000000e+00 : f32
    %21 = vector.broadcast %cst_15 : f32 to vector<16x64xf32>
    %22 = arith.maximumf %20, %21 : vector<16x64xf32>
    %23 = arith.truncf %22 : vector<16x64xf32> to vector<16x64xbf16>
    %c0_16 = arith.constant 0 : index
    %c0_17 = arith.constant 0 : index
    %24 = vector.load %arg8[%c0_16, %c0_17] : memref<48x64xbf16, #tpu.memory_space<vmem>>, vector<16x64xbf16>
    tpu.vector_store %arg8[%c0_16, %c0_17], %23 {strides = array<i32>} : memref<48x64xbf16, #tpu.memory_space<vmem>>, vector<16x64xbf16>,
    %25 = vector.extract_strided_slice %17 {offsets = [16, 0], sizes = [16, 64], strides = [1, 1]} : vector<48x64xf32> to vector<16x64xf32>
    %26 = arith.truncf %25 : vector<16x64xf32> to vector<16x64xbf16>
    %cst_18 = arith.constant dense<0.000000e+00> : vector<16x64xf32>
    %27 = tpu.matmul %26, %11, %cst_18 {dimension_numbers = #tpu.dot_dimension_numbers<[1], [1], [0], [0], [0, 0, 1, 0], [], []>} : vector<16x64xbf16>, vector<64x64xbf16>, vector<16x64xf32> -> vector<16x64xf32>
    %28 = vector.broadcast %3 : vector<16x1xf32> to vector<16x64xf32>
    %29 = arith.addf %27, %28 : vector<16x64xf32>
    %cst_19 = arith.constant 0.000000e+00 : f32
    %30 = vector.broadcast %cst_19 : f32 to vector<16x64xf32>
    %31 = arith.maximumf %29, %30 : vector<16x64xf32>
    %32 = arith.truncf %31 : vector<16x64xf32> to vector<16x64xbf16>
    %c16 = arith.constant 16 : index
    %c0_20 = arith.constant 0 : index
    %33 = vector.load %arg8[%c16, %c0_20] : memref<48x64xbf16, #tpu.memory_space<vmem>>, vector<16x64xbf16>
    tpu.vector_store %arg8[%c16, %c0_20], %32 {strides = array<i32>} : memref<48x64xbf16, #tpu.memory_space<vmem>>, vector<16x64xbf16>,
    %34 = vector.extract_strided_slice %17 {offsets = [32, 0], sizes = [16, 64], strides = [1, 1]} : vector<48x64xf32> to vector<16x64xf32>
    %35 = arith.truncf %34 : vector<16x64xf32> to vector<16x64xbf16>
    %cst_21 = arith.constant dense<0.000000e+00> : vector<16x64xf32>
    %36 = tpu.matmul %35, %14, %cst_21 {dimension_numbers = #tpu.dot_dimension_numbers<[1], [1], [0], [0], [0, 0, 1, 0], [], []>} : vector<16x64xbf16>, vector<64x64xbf16>, vector<16x64xf32> -> vector<16x64xf32>
    %37 = vector.broadcast %4 : vector<16x1xf32> to vector<16x64xf32>
    %38 = arith.addf %36, %37 : vector<16x64xf32>
    %cst_22 = arith.constant 0.000000e+00 : f32
    %39 = vector.broadcast %cst_22 : f32 to vector<16x64xf32>
    %40 = arith.maximumf %38, %39 : vector<16x64xf32>
    %41 = arith.truncf %40 : vector<16x64xf32> to vector<16x64xbf16>
    %c32 = arith.constant 32 : index
    %c0_23 = arith.constant 0 : index
    %42 = vector.load %arg8[%c32, %c0_23] : memref<48x64xbf16, #tpu.memory_space<vmem>>, vector<16x64xbf16>
    tpu.vector_store %arg8[%c32, %c0_23], %41 {strides = array<i32>} : memref<48x64xbf16, #tpu.memory_space<vmem>>, vector<16x64xbf16>,
    %c0_24 = arith.constant 0 : index
    %c0_25 = arith.constant 0 : index
    %43 = vector.load %arg8[%c0_24, %c0_25] : memref<48x64xbf16, #tpu.memory_space<vmem>>, vector<48x64xbf16>
    %cst_26 = arith.constant dense<0.000000e+00> : vector<32x64xf32>
    %44 = tpu.matmul %0, %43, %cst_26 {dimension_numbers = #tpu.dot_dimension_numbers<[1], [0], [0], [1], [0, 0, 1, 1], [], []>} : vector<32x48xbf16>, vector<48x64xbf16>, vector<32x64xf32> -> vector<32x64xf32>
    %45 = vector.broadcast %5 : vector<32x1xf32> to vector<32x64xf32>
    %46 = arith.addf %44, %45 : vector<32x64xf32>
    %47 = arith.addf %46, %7 : vector<32x64xf32>
    %cst_27 = arith.constant 0.000000e+00 : f32
    %48 = vector.broadcast %cst_27 : f32 to vector<32x64xf32>
    %49 = arith.maximumf %47, %48 : vector<32x64xf32>
    %c0_28 = arith.constant 0 : index
    %c0_29 = arith.constant 0 : index
    %50 = vector.load %arg7[%c0_28, %c0_29] : memref<32x128xf32, #tpu.memory_space<vmem>>, vector<32x64xf32>
    tpu.vector_store %arg7[%c0_28, %c0_29], %49 {strides = array<i32>} : memref<32x128xf32, #tpu.memory_space<vmem>>, vector<32x64xf32>,
    %c1 = arith.constant 1 : index
    %c0_30 = arith.constant 0 : index
    %c0_31 = arith.constant 0 : index
    %51 = vector.load %arg1[%c1, %c0_30, %c0_31] : memref<2x32x64xf32, #tpu.memory_space<vmem>>, vector<1x32x64xf32>
    %52 = vector.shape_cast %51 : vector<1x32x64xf32> to vector<32x64xf32>
    %53 = arith.truncf %52 : vector<32x64xf32> to vector<32x64xbf16>
    %c1_32 = arith.constant 1 : index
    %c0_33 = arith.constant 0 : index
    %c0_34 = arith.constant 0 : index
    %54 = vector.load %arg2[%c1_32, %c0_33, %c0_34] : memref<2x64x64xf32, #tpu.memory_space<vmem>>, vector<1x64x64xf32>
    %55 = vector.shape_cast %54 : vector<1x64x64xf32> to vector<64x64xf32>
    %56 = arith.truncf %55 : vector<64x64xf32> to vector<64x64xbf16>
    %c1_35 = arith.constant 1 : index
    %c0_36 = arith.constant 0 : index
    %c0_37 = arith.constant 0 : index
    %57 = vector.load %arg3[%c1_35, %c0_36, %c0_37] : memref<2x64x64xf32, #tpu.memory_space<vmem>>, vector<1x64x64xf32>
    %58 = vector.shape_cast %57 : vector<1x64x64xf32> to vector<64x64xf32>
    %59 = arith.truncf %58 : vector<64x64xf32> to vector<64x64xbf16>
    %c1_38 = arith.constant 1 : index
    %c0_39 = arith.constant 0 : index
    %c0_40 = arith.constant 0 : index
    %60 = vector.load %arg4[%c1_38, %c0_39, %c0_40] : memref<2x48x32xbf16, #tpu.memory_space<vmem>>, vector<1x48x32xbf16>
    %61 = vector.shape_cast %60 : vector<1x48x32xbf16> to vector<48x32xbf16>
    %cst_41 = arith.constant dense<0.000000e+00> : vector<48x64xf32>
    %62 = tpu.matmul %61, %53, %cst_41 {dimension_numbers = #tpu.dot_dimension_numbers<[1], [0], [0], [1], [0, 0, 1, 1], [], []>} : vector<48x32xbf16>, vector<32x64xbf16>, vector<48x64xf32> -> vector<48x64xf32>
    %63 = vector.extract_strided_slice %62 {offsets = [0, 0], sizes = [16, 64], strides = [1, 1]} : vector<48x64xf32> to vector<16x64xf32>
    %64 = vector.broadcast %2 : vector<16x1xf32> to vector<16x64xf32>
    %65 = arith.addf %63, %64 : vector<16x64xf32>
    %cst_42 = arith.constant 0.000000e+00 : f32
    %66 = vector.broadcast %cst_42 : f32 to vector<16x64xf32>
    %67 = arith.maximumf %65, %66 : vector<16x64xf32>
    %68 = arith.truncf %67 : vector<16x64xf32> to vector<16x64xbf16>
    %c0_43 = arith.constant 0 : index
    %c0_44 = arith.constant 0 : index
    %69 = vector.load %arg8[%c0_43, %c0_44] : memref<48x64xbf16, #tpu.memory_space<vmem>>, vector<16x64xbf16>
    tpu.vector_store %arg8[%c0_43, %c0_44], %68 {strides = array<i32>} : memref<48x64xbf16, #tpu.memory_space<vmem>>, vector<16x64xbf16>,
    %70 = vector.extract_strided_slice %62 {offsets = [16, 0], sizes = [16, 64], strides = [1, 1]} : vector<48x64xf32> to vector<16x64xf32>
    %71 = arith.truncf %70 : vector<16x64xf32> to vector<16x64xbf16>
    %cst_45 = arith.constant dense<0.000000e+00> : vector<16x64xf32>
    %72 = tpu.matmul %71, %56, %cst_45 {dimension_numbers = #tpu.dot_dimension_numbers<[1], [1], [0], [0], [0, 0, 1, 0], [], []>} : vector<16x64xbf16>, vector<64x64xbf16>, vector<16x64xf32> -> vector<16x64xf32>
    %73 = vector.broadcast %3 : vector<16x1xf32> to vector<16x64xf32>
    %74 = arith.addf %72, %73 : vector<16x64xf32>
    %cst_46 = arith.constant 0.000000e+00 : f32
    %75 = vector.broadcast %cst_46 : f32 to vector<16x64xf32>
    %76 = arith.maximumf %74, %75 : vector<16x64xf32>
    %77 = arith.truncf %76 : vector<16x64xf32> to vector<16x64xbf16>
    %c16_47 = arith.constant 16 : index
    %c0_48 = arith.constant 0 : index
    %78 = vector.load %arg8[%c16_47, %c0_48] : memref<48x64xbf16, #tpu.memory_space<vmem>>, vector<16x64xbf16>
    tpu.vector_store %arg8[%c16_47, %c0_48], %77 {strides = array<i32>} : memref<48x64xbf16, #tpu.memory_space<vmem>>, vector<16x64xbf16>,
    %79 = vector.extract_strided_slice %62 {offsets = [32, 0], sizes = [16, 64], strides = [1, 1]} : vector<48x64xf32> to vector<16x64xf32>
    %80 = arith.truncf %79 : vector<16x64xf32> to vector<16x64xbf16>
    %cst_49 = arith.constant dense<0.000000e+00> : vector<16x64xf32>
    %81 = tpu.matmul %80, %59, %cst_49 {dimension_numbers = #tpu.dot_dimension_numbers<[1], [1], [0], [0], [0, 0, 1, 0], [], []>} : vector<16x64xbf16>, vector<64x64xbf16>, vector<16x64xf32> -> vector<16x64xf32>
    %82 = vector.broadcast %4 : vector<16x1xf32> to vector<16x64xf32>
    %83 = arith.addf %81, %82 : vector<16x64xf32>
    %cst_50 = arith.constant 0.000000e+00 : f32
    %84 = vector.broadcast %cst_50 : f32 to vector<16x64xf32>
    %85 = arith.maximumf %83, %84 : vector<16x64xf32>
    %86 = arith.truncf %85 : vector<16x64xf32> to vector<16x64xbf16>
    %c32_51 = arith.constant 32 : index
    %c0_52 = arith.constant 0 : index
    %87 = vector.load %arg8[%c32_51, %c0_52] : memref<48x64xbf16, #tpu.memory_space<vmem>>, vector<16x64xbf16>
    tpu.vector_store %arg8[%c32_51, %c0_52], %86 {strides = array<i32>} : memref<48x64xbf16, #tpu.memory_space<vmem>>, vector<16x64xbf16>,
    %c0_53 = arith.constant 0 : index
    %c0_54 = arith.constant 0 : index
    %88 = vector.load %arg8[%c0_53, %c0_54] : memref<48x64xbf16, #tpu.memory_space<vmem>>, vector<48x64xbf16>
    %cst_55 = arith.constant dense<0.000000e+00> : vector<32x64xf32>
    %89 = tpu.matmul %0, %88, %cst_55 {dimension_numbers = #tpu.dot_dimension_numbers<[1], [0], [0], [1], [0, 0, 1, 1], [], []>} : vector<32x48xbf16>, vector<48x64xbf16>, vector<32x64xf32> -> vector<32x64xf32>
    %90 = vector.broadcast %5 : vector<32x1xf32> to vector<32x64xf32>
    %91 = arith.addf %89, %90 : vector<32x64xf32>
    %92 = arith.addf %91, %52 : vector<32x64xf32>
    %cst_56 = arith.constant 0.000000e+00 : f32
    %93 = vector.broadcast %cst_56 : f32 to vector<32x64xf32>
    %94 = arith.maximumf %92, %93 : vector<32x64xf32>
    %c0_57 = arith.constant 0 : index
    %c64 = arith.constant 64 : index
    %95 = vector.load %arg7[%c0_57, %c64] : memref<32x128xf32, #tpu.memory_space<vmem>>, vector<32x64xf32>
    tpu.vector_store %arg7[%c0_57, %c64], %94 {strides = array<i32>} : memref<32x128xf32, #tpu.memory_space<vmem>>, vector<32x64xf32>,
    return
  }
  func.func @transform_0(%arg0: i32) -> (i32, i32, i32) {
    %c0_i32 = arith.constant 0 : i32
    %c0_i32_0 = arith.constant 0 : i32
    %c0_i32_1 = arith.constant 0 : i32
    %c0_i32_2 = arith.constant 0 : i32
    return %c0_i32, %c0_i32_0, %c0_i32_1 : i32, i32, i32
  }
  func.func @transform_1(%arg0: i32) -> (i32, i32, i32) {
    %c0_i32 = arith.constant 0 : i32
    %c0_i32_0 = arith.constant 0 : i32
    %c0_i32_1 = arith.constant 0 : i32
    %c0_i32_2 = arith.constant 0 : i32
    return %c0_i32, %c0_i32_0, %c0_i32_1 : i32, i32, i32
  }
  func.func @transform_2(%arg0: i32) -> (i32, i32, i32) {
    %c0_i32 = arith.constant 0 : i32
    %c0_i32_0 = arith.constant 0 : i32
    %c0_i32_1 = arith.constant 0 : i32
    %c0_i32_2 = arith.constant 0 : i32
    return %c0_i32, %c0_i32_0, %c0_i32_1 : i32, i32, i32
  }
  func.func @transform_3(%arg0: i32) -> (i32, i32, i32) {
    %c0_i32 = arith.constant 0 : i32
    %c0_i32_0 = arith.constant 0 : i32
    %c0_i32_1 = arith.constant 0 : i32
    %c0_i32_2 = arith.constant 0 : i32
    return %c0_i32, %c0_i32_0, %c0_i32_1 : i32, i32, i32
  }
  func.func @transform_4(%arg0: i32) -> (i32, i32) {
    %c0_i32 = arith.constant 0 : i32
    %c0_i32_0 = arith.constant 0 : i32
    %c0_i32_1 = arith.constant 0 : i32
    return %c0_i32, %c0_i32_0 : i32, i32
  }
  func.func @transform_5(%arg0: i32) -> (i32, i32) {
    %c0_i32 = arith.constant 0 : i32
    %c0_i32_0 = arith.constant 0 : i32
    %c0_i32_1 = arith.constant 0 : i32
    return %c0_i32, %c0_i32_0 : i32, i32
  }
  func.func @transform_6(%arg0: i32) -> (i32, i32) {
    %c0_i32 = arith.constant 0 : i32
    %c0_i32_0 = arith.constant 0 : i32
    %c0_i32_1 = arith.constant 0 : i32
    return %c0_i32, %c0_i32_0 : i32, i32
  }
}

</mosaic_0001>

<llo_original>
// kernel: graph_convolution_layer.1
$region0: #{graph_convolution_layer.1}
  #allocation0 [shape = 'u32[]', space=smem, size = 0x4, offset = 0x4, fixed_abs, tag = 'smem constant byte address 0x4 - core index']
  #allocation1 [shape = 'u32[144,128]{1,0:T(1,128)}', space=vmem, size = 0x12000, scoped, tag = 'internal scratch']
  #allocation2 [shape = 'bf16[48,64]{1,0:T(8,128)(2,1)}', space=vmem, size = 0x3000, scoped, tag = 'scratch operand']
  %s0 = inlined_call_operand.hbm [shape: f32[2,32,64], index: 0, kind: input, shape index: {}]
  %s1 = inlined_call_operand.vmem [shape: f32[2,64,64], index: 1, kind: input, shape index: {}]
  %s2 = inlined_call_operand.hbm [shape: f32[2,64,64], index: 2, kind: input, shape index: {}]
  %s3 = inlined_call_operand.vmem [shape: bf16[2,48,32], index: 3, kind: input, shape index: {}]
  %s4 = inlined_call_operand.hbm [shape: bf16[32,48], index: 4, kind: input, shape index: {}]
  %s5 = inlined_call_operand.vmem [shape: f32[48,2], index: 5, kind: input, shape index: {}]
  %s6 = inlined_call_operand.vmem [shape: f32[32,128], index: 6, kind: output, shape index: {}]
  %s7 = sld [smem:[#allocation0]]
  $region46: #{graph_convolution_layer.1} parent=0
    _
  %s9 = ssub.s32 1, %s7
  %s10 = scalar_select 0, %s9, %s7
  $region1: #{graph_convolution_layer.1} parent=0
    #allocation3 [shape = 'u8[32768]{0}', space=vmem, size = 0x8000, scoped, tag = 'input window, operand 0, single buffered']
    #allocation4 [shape = 's32[1]{0}', space=sflag, size = 0x4, scoped, tag = 'scoped memory for graph_convolution_layer.1']
    #allocation5 [shape = 'u8[65536]{0}', space=vmem, size = 0x10000, scoped, tag = 'input window, operand 2, single buffered']
    #allocation6 [shape = 's32[1]{0}', space=sflag, size = 0x4, scoped, tag = 'scoped memory for graph_convolution_layer.1']
    #allocation7 [shape = 'u8[8192]{0}', space=vmem, size = 0x2000, scoped, tag = 'input window, operand 4, single buffered']
    %11 = vsyncpa [#allocation4], 0
    %12 = vsyncpa [#allocation6], 0
    // Predicated region
    $region2: #{graph_convolution_layer.1} parent=1 // pred_check
      _
    $region3: #{graph_convolution_layer.1} parent=1 // pred_check_branch
      %14 = sbr.rel (0) target = $region5
    $region4: #{graph_convolution_layer.1} parent=1 // pred_region
      %s16 = ssub.s32 1024, 1024
      %17 = vsyncadd [#allocation4], %s16
      %s18 = sshll.u32 [#allocation3], 4
      %s19 = int_to_ptr.vmem [resolvable:$true] %s18
      %24 = dma.hbm_to_vmem [thread:$0]  %s0, 1024, %s19, [#allocation4], 128, 128, 8
    $region5: #{graph_convolution_layer.1} parent=1 // pred_fallthru
      _
    // Predicated region
    $region6: #{graph_convolution_layer.1} parent=1 // pred_check
      _
    $region7: #{graph_convolution_layer.1} parent=1 // pred_check_branch
      %26 = sbr.rel (0) target = $region9
    $region8: #{graph_convolution_layer.1} parent=1 // pred_region
      _
    $region9: #{graph_convolution_layer.1} parent=1 // pred_fallthru
      _
    // Predicated region
    $region10: #{graph_convolution_layer.1} parent=1 // pred_check
      _
    $region11: #{graph_convolution_layer.1} parent=1 // pred_check_branch
      %28 = sbr.rel (0) target = $region13
    $region12: #{graph_convolution_layer.1} parent=1 // pred_region
      %s30 = ssub.s32 2048, 2048
      %31 = vsyncadd [#allocation6], %s30
      %s32 = sshll.u32 [#allocation5], 4
      %s33 = int_to_ptr.vmem [resolvable:$true] %s32
      %38 = dma.hbm_to_vmem [thread:$0]  %s2, 2048, %s33, [#allocation6], 128, 128, 8
    $region13: #{graph_convolution_layer.1} parent=1 // pred_fallthru
      _
    // Predicated region
    $region14: #{graph_convolution_layer.1} parent=1 // pred_check
      _
    $region15: #{graph_convolution_layer.1} parent=1 // pred_check_branch
      %40 = sbr.rel (0) target = $region17
    $region16: #{graph_convolution_layer.1} parent=1 // pred_region
      _
    $region17: #{graph_convolution_layer.1} parent=1 // pred_fallthru
      _
    // Predicated region
    $region18: #{graph_convolution_layer.1} parent=1 // pred_check
      _
    $region19: #{graph_convolution_layer.1} parent=1 // pred_check_branch
      %42 = sbr.rel (0) target = $region21
    $region20: #{graph_convolution_layer.1} parent=1 // pred_region
      %s44 = ssub.s32 256, 256
      %45 = vsyncadd [#allocation6], %s44
      %s46 = sshll.u32 [#allocation7], 4
      %s47 = int_to_ptr.vmem [resolvable:$true] %s46
      %52 = dma.hbm_to_vmem [thread:$0]  %s4, 256, %s47, [#allocation6], 64, 64, 4
    $region21: #{graph_convolution_layer.1} parent=1 // pred_fallthru
      _
    // Predicated region
    $region22: #{graph_convolution_layer.1} parent=1 // pred_check
      _
    $region23: #{graph_convolution_layer.1} parent=1 // pred_check_branch
      %54 = sbr.rel (0) target = $region25
    $region24: #{graph_convolution_layer.1} parent=1 // pred_region
      _
    $region25: #{graph_convolution_layer.1} parent=1 // pred_fallthru
      _
    // Predicated region
    $region26: #{graph_convolution_layer.1} parent=1 // pred_check
      _
    $region27: #{graph_convolution_layer.1} parent=1 // pred_check_branch
      %56 = sbr.rel (0) target = $region29
    $region28: #{graph_convolution_layer.1} parent=1 // pred_region
      %57 = dma.done [#allocation4], 1024
    $region29: #{graph_convolution_layer.1} parent=1 // pred_fallthru
      _
    // Predicated region
    $region30: #{graph_convolution_layer.1} parent=1 // pred_check
      _
    $region31: #{graph_convolution_layer.1} parent=1 // pred_check_branch
      %59 = sbr.rel (0) target = $region33
    $region32: #{graph_convolution_layer.1} parent=1 // pred_region
      %60 = dma.done [#allocation6], 2048
    $region33: #{graph_convolution_layer.1} parent=1 // pred_fallthru
      _
    // Predicated region
    $region34: #{graph_convolution_layer.1} parent=1 // pred_check
      _
    $region35: #{graph_convolution_layer.1} parent=1 // pred_check_branch
      %62 = sbr.rel (0) target = $region37
    $region36: #{graph_convolution_layer.1} parent=1 // pred_region
      %63 = dma.done [#allocation6], 256
    $region37: #{graph_convolution_layer.1} parent=1 // pred_fallthru
      _
    %v65 = vld [vmem:[#allocation7] sm:$0xf]
    %v66 = vld [vmem:[#allocation7 + $0x4] sm:$0xf]
    %v67 = vld [vmem:[#allocation7 + $0x8] sm:$0xf]
    %v68 = vld [vmem:[#allocation7 + $0xc] sm:$0xf]
    %v69 = vld [vmem:[%s5] sm:$0xff]
    %v70 = vld [vmem:[%s5 + $0x8] sm:$0xff]
    %v71 = vld [vmem:[%s5 + $0x10] sm:$0xff]
    %v72 = vld [vmem:[%s5 + $0x18] sm:$0xff]
    %v73 = vld [vmem:[%s5 + $0x20] sm:$0xff]
    %v74 = vld [vmem:[%s5 + $0x28] sm:$0xff]
    %v75 = vld [vmem:[#allocation3] sm:$0xff]
    %v76 = vld [vmem:[#allocation3 + $0x8] sm:$0xff]
    %v77 = vld [vmem:[#allocation3 + $0x10] sm:$0xff]
    %v78 = vld [vmem:[#allocation3 + $0x18] sm:$0xff]
    %v79 = vpack.c.bf16 %v76, %v75
    %v80 = vpack.c.bf16 %v78, %v77
    %v81 = vld [vmem:[%s1] sm:$0xff]
    %v82 = vld [vmem:[%s1 + $0x8] sm:$0xff]
    %v83 = vld [vmem:[%s1 + $0x10] sm:$0xff]
    %v84 = vld [vmem:[%s1 + $0x18] sm:$0xff]
    %v85 = vld [vmem:[%s1 + $0x20] sm:$0xff]
    %v86 = vld [vmem:[%s1 + $0x28] sm:$0xff]
    %v87 = vld [vmem:[%s1 + $0x30] sm:$0xff]
    %v88 = vld [vmem:[%s1 + $0x38] sm:$0xff]
    %v89 = vpack.c.bf16 %v82, %v81
    %v90 = vpack.c.bf16 %v84, %v83
    %v91 = vpack.c.bf16 %v86, %v85
    %v92 = vpack.c.bf16 %v88, %v87
    %v93 = vld [vmem:[#allocation5] sm:$0xff]
    %v94 = vld [vmem:[#allocation5 + $0x8] sm:$0xff]
    %v95 = vld [vmem:[#allocation5 + $0x10] sm:$0xff]
    %v96 = vld [vmem:[#allocation5 + $0x18] sm:$0xff]
    %v97 = vld [vmem:[#allocation5 + $0x20] sm:$0xff]
    %v98 = vld [vmem:[#allocation5 + $0x28] sm:$0xff]
    %v99 = vld [vmem:[#allocation5 + $0x30] sm:$0xff]
    %v100 = vld [vmem:[#allocation5 + $0x38] sm:$0xff]
    %v101 = vpack.c.bf16 %v94, %v93
    %v102 = vpack.c.bf16 %v96, %v95
    %v103 = vpack.c.bf16 %v98, %v97
    %v104 = vpack.c.bf16 %v100, %v99
    %v105 = vld [vmem:[%s3] sm:$0xf]
    %v106 = vld [vmem:[%s3 + $0x4] sm:$0xf]
    %v107 = vld [vmem:[%s3 + $0x8] sm:$0xf]
    %v108 = vld [vmem:[%s3 + $0xc] sm:$0xf]
    %v109 = vld [vmem:[%s3 + $0x10] sm:$0xf]
    %v110 = vld [vmem:[%s3 + $0x14] sm:$0xf]
    %v117 = vunpack.c.l.b16 %v105
    %v118 = vunpack.c.l.b16 %v106
    %v119 = vunpack.c.l.b16 %v107
    %v120 = vunpack.c.l.b16 %v108
    %v121 = vunpack.c.l.b16 %v109
    %v122 = vunpack.c.l.b16 %v110
    %v123 = vpack.c.b16 %v118, %v117
    %v124 = vpack.c.b16 %v120, %v119
    %v125 = vpack.c.b16 %v122, %v121
    %vm126 = vcmask 261120
    %v128 = vsel %vm126, %v123, 0
    %v131 = vsel %vm126, %v124, 0
    %v134 = vsel %vm126, %v125, 0
    %136 = vmatprep.subr.bf16.mxu0 0
    %137 = vmatpush1.bf16.msra.mxu0 0
    %138 = vmatprep.subr.bf16.mxu0 0
    %139 = vmatpush1.bf16.msra.mxu0 0
    %140 = vmatprep.subr.bf16.mxu0 0
    %141 = vmatpush1.bf16.msra.mxu0 0
    %142 = vmatprep.subr.bf16.mxu0 0
    %143 = vmatpush1.bf16.msra.mxu0 0
    %144 = vmatprep.subr.bf16.mxu0 0
    %145 = vmatpush1.bf16.msra.mxu0 0
    %146 = vmatprep.subr.bf16.mxu0 0
    %147 = vmatpush1.bf16.msra.mxu0 0
    %148 = vmatprep.subr.bf16.mxu0 0
    %149 = vmatpush1.bf16.msra.mxu0 %v80
    %150 = vmatprep.subr.bf16.mxu0 0
    %151 = vmatpush1.bf16.msra.mxu0 %v79
    %152 = vmatprep.subr.bf16.mxu0 0
    %153 = vmatpush2.bf16.msra.mxu0 0
    %154 = vmatprep.subr.bf16.mxu0 0
    %155 = vmatpush2.bf16.msra.mxu0 0
    %156 = vmatprep.subr.bf16.mxu0 0
    %157 = vmatpush2.bf16.msra.mxu0 0
    %158 = vmatprep.subr.bf16.mxu0 0
    %159 = vmatpush2.bf16.msra.mxu0 0
    %160 = vmatprep.subr.bf16.mxu0 0
    %161 = vmatpush2.bf16.msra.mxu0 0
    %162 = vmatprep.subr.bf16.mxu0 0
    %163 = vmatpush2.bf16.msra.mxu0 0
    %164 = vmatprep.subr.bf16.mxu0 0
    %165 = vmatpush2.bf16.msra.mxu0 0
    %166 = vmatprep.subr.bf16.mxu0 0
    %167 = vmatpush2.bf16.msra.mxu0 0
    %168 = vmatprep.mubr.bf16.mxu0 0
    %169 = vmatmul.mubr.bf16.gmra.mxu0 %v128
    %v170 = vpop.f32.mrf.mxu0
    %v171 = vadd.f32 0.0, %v170
    %v172 = vpop.f32.mrf.mxu0
    %v173 = vpop.f32.mrf.mxu0
    %v174 = vadd.f32 0.0, %v173
    %v175 = vpop.f32.mrf.mxu0
    %176 = vmatprep.mubr.bf16.mxu0 0
    %177 = vmatmul.mubr.bf16.gmra.mxu0 %v131
    %v178 = vpop.f32.mrf.mxu0
    %v179 = vadd.f32 0.0, %v178
    %v180 = vpop.f32.mrf.mxu0
    %v181 = vpop.f32.mrf.mxu0
    %v182 = vadd.f32 0.0, %v181
    %v183 = vpop.f32.mrf.mxu0
    %184 = vmatprep.mubr.bf16.mxu0 0
    %185 = vmatmul.mubr.bf16.gmra.mxu0 %v134
    %v186 = vpop.f32.mrf.mxu0
    %v187 = vadd.f32 0.0, %v186
    %v188 = vpop.f32.mrf.mxu0
    %v189 = vpop.f32.mrf.mxu0
    %v190 = vadd.f32 0.0, %v189
    %v191 = vpop.f32.mrf.mxu0
    %192 = vdwg.mxu0
    %194 = vset.pattern.permute.xlu0 0
    %195 = vperm.xlu0 %194, %v69
    %v196 = vpop.permute.xlu0 %195
    %199 = vset.pattern.permute.xlu0 0
    %200 = vperm.xlu0 %199, %v70
    %v201 = vpop.permute.xlu0 %200
    %v203 = vadd.f32 %v171, %v196
    %v204 = vadd.f32 %v174, %v201
    %v205 = vmax.f32 %v203, 0.0
    %v206 = vmax.f32 %v204, 0.0
    %v207 = vpack.c.bf16 %v206, %v205
    %v209 = vunpack.c.l.b16 %v207
    %v210 = vunpack.c.h.b16 %v207
    %v211 = vpack.c.b16 %v209, %v209
    %v212 = vpack.c.b16 %v210, %v210
    %vm215 = vcmask 519168
    %216 = vst.msk [vmem:[#allocation2] sm:$0xf] %vm215, %v211
    %217 = vst.msk [vmem:[#allocation2 + $0x4] sm:$0xf] %vm215, %v212
    %v218 = vpack.c.bf16 %v182, %v179
    %220 = vset.pattern.permute.xlu0 0
    %221 = vperm.xlu0 %220, %v71
    %v222 = vpop.permute.xlu0 %221
    %225 = vset.pattern.permute.xlu0 0
    %226 = vperm.xlu0 %225, %v72
    %v227 = vpop.permute.xlu0 %226
    %vm229 = vcmask 523264
    %v231 = vsel %vm229, %v218, 0
    %v234 = vsel %vm229, %v89, 0
    %v237 = vsel %vm229, %v90, 0
    %v240 = vsel %vm229, %v91, 0
    %v243 = vsel %vm229, %v92, 0
    %245 = vmatprep.subr.bf16.mxu0 0
    %246 = vmatpush1.bf16.xpose.msra.mxu0 0
    %247 = vmatprep.subr.bf16.mxu0 0
    %248 = vmatpush1.bf16.xpose.msra.mxu0 0
    %249 = vmatprep.subr.bf16.mxu0 0
    %250 = vmatpush1.bf16.xpose.msra.mxu0 0
    %251 = vmatprep.subr.bf16.mxu0 0
    %252 = vmatpush1.bf16.xpose.msra.mxu0 0
    %253 = vmatprep.subr.bf16.mxu0 0
    %254 = vmatpush1.bf16.xpose.msra.mxu0 %v243
    %255 = vmatprep.subr.bf16.mxu0 0
    %256 = vmatpush1.bf16.xpose.msra.mxu0 %v240
    %257 = vmatprep.subr.bf16.mxu0 0
    %258 = vmatpush1.bf16.xpose.msra.mxu0 %v237
    %259 = vmatprep.subr.bf16.mxu0 0
    %260 = vmatpush1.bf16.xpose.msra.mxu0 %v234
    %261 = vmatprep.subr.bf16.mxu0 0
    %262 = vmatpush2.bf16.xpose.msra.mxu0 0
    %263 = vmatprep.subr.bf16.mxu0 0
    %264 = vmatpush2.bf16.xpose.msra.mxu0 0
    %265 = vmatprep.subr.bf16.mxu0 0
    %266 = vmatpush2.bf16.xpose.msra.mxu0 0
    %267 = vmatprep.subr.bf16.mxu0 0
    %268 = vmatpush2.bf16.xpose.msra.mxu0 0
    %269 = vmatprep.subr.bf16.mxu0 0
    %270 = vmatpush2.bf16.xpose.msra.mxu0 0
    %271 = vmatprep.subr.bf16.mxu0 0
    %272 = vmatpush2.bf16.xpose.msra.mxu0 0
    %273 = vmatprep.subr.bf16.mxu0 0
    %274 = vmatpush2.bf16.xpose.msra.mxu0 0
    %275 = vmatprep.subr.bf16.mxu0 0
    %276 = vmatpush2.bf16.xpose.msra.mxu0 0
    %277 = vmatprep.mubr.bf16.mxu0 0
    %278 = vmatmul.mubr.bf16.gmra.mxu0 %v231
    %v279 = vpop.f32.mrf.mxu0
    %v280 = vadd.f32 %v222, %v279
    %v281 = vpop.f32.mrf.mxu0
    %v282 = vpop.f32.mrf.mxu0
    %v283 = vadd.f32 %v227, %v282
    %v284 = vpop.f32.mrf.mxu0
    %285 = vdwg.mxu0
    %v286 = vmax.f32 %v280, 0.0
    %v287 = vmax.f32 %v283, 0.0
    %v288 = vpack.c.bf16 %v287, %v286
    %v290 = vunpack.c.l.b16 %v288
    %v291 = vunpack.c.h.b16 %v288
    %v292 = vpack.c.b16 %v290, %v290
    %v293 = vpack.c.b16 %v291, %v291
    %296 = vst.msk [vmem:[#allocation2 + $0x8] sm:$0xf] %vm215, %v292
    %297 = vst.msk [vmem:[#allocation2 + $0xc] sm:$0xf] %vm215, %v293
    %v298 = vpack.c.bf16 %v190, %v187
    %300 = vset.pattern.permute.xlu0 0
    %301 = vperm.xlu0 %300, %v73
    %v302 = vpop.permute.xlu0 %301
    %305 = vset.pattern.permute.xlu0 0
    %306 = vperm.xlu0 %305, %v74
    %v307 = vpop.permute.xlu0 %306
    %v310 = vsel %vm229, %v298, 0
    %v313 = vsel %vm229, %v101, 0
    %v316 = vsel %vm229, %v102, 0
    %v319 = vsel %vm229, %v103, 0
    %v322 = vsel %vm229, %v104, 0
    %324 = vmatprep.subr.bf16.mxu0 0
    %325 = vmatpush1.bf16.xpose.msra.mxu0 0
    %326 = vmatprep.subr.bf16.mxu0 0
    %327 = vmatpush1.bf16.xpose.msra.mxu0 0
    %328 = vmatprep.subr.bf16.mxu0 0
    %329 = vmatpush1.bf16.xpose.msra.mxu0 0
    %330 = vmatprep.subr.bf16.mxu0 0
    %331 = vmatpush1.bf16.xpose.msra.mxu0 0
    %332 = vmatprep.subr.bf16.mxu0 0
    %333 = vmatpush1.bf16.xpose.msra.mxu0 %v322
    %334 = vmatprep.subr.bf16.mxu0 0
    %335 = vmatpush1.bf16.xpose.msra.mxu0 %v319
    %336 = vmatprep.subr.bf16.mxu0 0
    %337 = vmatpush1.bf16.xpose.msra.mxu0 %v316
    %338 = vmatprep.subr.bf16.mxu0 0
    %339 = vmatpush1.bf16.xpose.msra.mxu0 %v313
    %340 = vmatprep.subr.bf16.mxu0 0
    %341 = vmatpush2.bf16.xpose.msra.mxu0 0
    %342 = vmatprep.subr.bf16.mxu0 0
    %343 = vmatpush2.bf16.xpose.msra.mxu0 0
    %344 = vmatprep.subr.bf16.mxu0 0
    %345 = vmatpush2.bf16.xpose.msra.mxu0 0
    %346 = vmatprep.subr.bf16.mxu0 0
    %347 = vmatpush2.bf16.xpose.msra.mxu0 0
    %348 = vmatprep.subr.bf16.mxu0 0
    %349 = vmatpush2.bf16.xpose.msra.mxu0 0
    %350 = vmatprep.subr.bf16.mxu0 0
    %351 = vmatpush2.bf16.xpose.msra.mxu0 0
    %352 = vmatprep.subr.bf16.mxu0 0
    %353 = vmatpush2.bf16.xpose.msra.mxu0 0
    %354 = vmatprep.subr.bf16.mxu0 0
    %355 = vmatpush2.bf16.xpose.msra.mxu0 0
    %356 = vmatprep.mubr.bf16.mxu0 0
    %357 = vmatmul.mubr.bf16.gmra.mxu0 %v310
    %v358 = vpop.f32.mrf.mxu0
    %v359 = vadd.f32 %v302, %v358
    %v360 = vpop.f32.mrf.mxu0
    %v361 = vpop.f32.mrf.mxu0
    %v362 = vadd.f32 %v307, %v361
    %v363 = vpop.f32.mrf.mxu0
    %364 = vdwg.mxu0
    %v365 = vmax.f32 %v359, 0.0
    %v366 = vmax.f32 %v362, 0.0
    %v367 = vpack.c.bf16 %v366, %v365
    %v369 = vunpack.c.l.b16 %v367
    %v370 = vunpack.c.h.b16 %v367
    %v371 = vpack.c.b16 %v369, %v369
    %v372 = vpack.c.b16 %v370, %v370
    %375 = vst.msk [vmem:[#allocation2 + $0x10] sm:$0xf] %vm215, %v371
    %376 = vst.msk [vmem:[#allocation2 + $0x14] sm:$0xf] %vm215, %v372
    %v377 = vld [vmem:[#allocation2] sm:$0xf]
    %v378 = vld [vmem:[#allocation2 + $0x4] sm:$0xf]
    %v379 = vld [vmem:[#allocation2 + $0x8] sm:$0xf]
    %v380 = vld [vmem:[#allocation2 + $0xc] sm:$0xf]
    %v381 = vld [vmem:[#allocation2 + $0x10] sm:$0xf]
    %v382 = vld [vmem:[#allocation2 + $0x14] sm:$0xf]
    %383 = vset.pattern.permute.xlu0 1
    %384 = vperm.xlu0 %383, %v69
    %v385 = vpop.permute.xlu0 %384
    %387 = vset.pattern.permute.xlu0 1
    %388 = vperm.xlu0 %387, %v70
    %v389 = vpop.permute.xlu0 %388
    %391 = vset.pattern.permute.xlu0 1
    %392 = vperm.xlu0 %391, %v71
    %v393 = vpop.permute.xlu0 %392
    %395 = vset.pattern.permute.xlu0 1
    %396 = vperm.xlu0 %395, %v72
    %v397 = vpop.permute.xlu0 %396
    %v403 = vunpack.c.l.b16 %v65
    %v404 = vunpack.c.l.b16 %v66
    %v405 = vunpack.c.l.b16 %v67
    %v406 = vunpack.c.l.b16 %v68
    %v407 = vpack.c.b16 %v404, %v403
    %v408 = vpack.c.b16 %v406, %v405
    %v415 = vunpack.c.l.b16 %v377
    %v416 = vunpack.c.l.b16 %v378
    %v417 = vunpack.c.l.b16 %v379
    %v418 = vunpack.c.l.b16 %v380
    %v419 = vunpack.c.l.b16 %v381
    %v420 = vunpack.c.l.b16 %v382
    %v421 = vpack.c.b16 %v416, %v415
    %v422 = vpack.c.b16 %v418, %v417
    %v423 = vpack.c.b16 %v420, %v419
    %vm427 = vcmask 392192
    %v429 = vsel %vm427, %v407, 0
    %v432 = vsel %vm427, %v408, 0
    %434 = vmatprep.subr.bf16.mxu0 0
    %435 = vmatpush1.bf16.msra.mxu0 0
    %436 = vmatprep.subr.bf16.mxu0 0
    %437 = vmatpush1.bf16.msra.mxu0 0
    %438 = vmatprep.subr.bf16.mxu0 0
    %439 = vmatpush1.bf16.msra.mxu0 0
    %440 = vmatprep.subr.bf16.mxu0 0
    %441 = vmatpush1.bf16.msra.mxu0 0
    %442 = vmatprep.subr.bf16.mxu0 0
    %443 = vmatpush1.bf16.msra.mxu0 0
    %444 = vmatprep.subr.bf16.mxu0 0
    %445 = vmatpush1.bf16.msra.mxu0 %v423
    %446 = vmatprep.subr.bf16.mxu0 0
    %447 = vmatpush1.bf16.msra.mxu0 %v422
    %448 = vmatprep.subr.bf16.mxu0 0
    %449 = vmatpush1.bf16.msra.mxu0 %v421
    %450 = vmatprep.subr.bf16.mxu0 0
    %451 = vmatpush2.bf16.msra.mxu0 0
    %452 = vmatprep.subr.bf16.mxu0 0
    %453 = vmatpush2.bf16.msra.mxu0 0
    %454 = vmatprep.subr.bf16.mxu0 0
    %455 = vmatpush2.bf16.msra.mxu0 0
    %456 = vmatprep.subr.bf16.mxu0 0
    %457 = vmatpush2.bf16.msra.mxu0 0
    %458 = vmatprep.subr.bf16.mxu0 0
    %459 = vmatpush2.bf16.msra.mxu0 0
    %460 = vmatprep.subr.bf16.mxu0 0
    %461 = vmatpush2.bf16.msra.mxu0 0
    %462 = vmatprep.subr.bf16.mxu0 0
    %463 = vmatpush2.bf16.msra.mxu0 0
    %464 = vmatprep.subr.bf16.mxu0 0
    %465 = vmatpush2.bf16.msra.mxu0 0
    %466 = vmatprep.mubr.bf16.mxu0 0
    %467 = vmatmul.mubr.bf16.gmra.mxu0 %v429
    %v468 = vpop.f32.mrf.mxu0
    %v469 = vadd.f32 %v385, %v468
    %v470 = vpop.f32.mrf.mxu0
    %v471 = vpop.f32.mrf.mxu0
    %v472 = vadd.f32 %v389, %v471
    %v473 = vpop.f32.mrf.mxu0
    %474 = vmatprep.mubr.bf16.mxu0 0
    %475 = vmatmul.mubr.bf16.gmra.mxu0 %v432
    %v476 = vpop.f32.mrf.mxu0
    %v477 = vadd.f32 %v393, %v476
    %v478 = vpop.f32.mrf.mxu0
    %v479 = vpop.f32.mrf.mxu0
    %v480 = vadd.f32 %v397, %v479
    %v481 = vpop.f32.mrf.mxu0
    %482 = vdwg.mxu0
    %v483 = vadd.f32 %v469, %v75
    %v484 = vadd.f32 %v472, %v76
    %v485 = vadd.f32 %v477, %v77
    %v486 = vadd.f32 %v480, %v78
    %v487 = vmax.f32 %v483, 0.0
    %v488 = vmax.f32 %v484, 0.0
    %v489 = vmax.f32 %v485, 0.0
    %v490 = vmax.f32 %v486, 0.0
    %491 = vst.msk [vmem:[%s6] sm:$0xff] %vm229, %v487
    %492 = vst.msk [vmem:[%s6 + $0x8] sm:$0xff] %vm229, %v488
    %493 = vst.msk [vmem:[%s6 + $0x10] sm:$0xff] %vm229, %v489
    %494 = vst.msk [vmem:[%s6 + $0x18] sm:$0xff] %vm229, %v490
    %s495 = scalar_lea.vmem [#allocation3], 32
    %v496 = vld [vmem:[%s495] sm:$0xff]
    %v497 = vld [vmem:[%s495 + $0x8] sm:$0xff]
    %v498 = vld [vmem:[%s495 + $0x10] sm:$0xff]
    %v499 = vld [vmem:[%s495 + $0x18] sm:$0xff]
    %v500 = vpack.c.bf16 %v497, %v496
    %v501 = vpack.c.bf16 %v499, %v498
    %s502 = scalar_lea.vmem %s1, 64
    %v503 = vld [vmem:[%s502] sm:$0xff]
    %v504 = vld [vmem:[%s502 + $0x8] sm:$0xff]
    %v505 = vld [vmem:[%s502 + $0x10] sm:$0xff]
    %v506 = vld [vmem:[%s502 + $0x18] sm:$0xff]
    %v507 = vld [vmem:[%s502 + $0x20] sm:$0xff]
    %v508 = vld [vmem:[%s502 + $0x28] sm:$0xff]
    %v509 = vld [vmem:[%s502 + $0x30] sm:$0xff]
    %v510 = vld [vmem:[%s502 + $0x38] sm:$0xff]
    %v511 = vpack.c.bf16 %v504, %v503
    %v512 = vpack.c.bf16 %v506, %v505
    %v513 = vpack.c.bf16 %v508, %v507
    %v514 = vpack.c.bf16 %v510, %v509
    %s515 = scalar_lea.vmem [#allocation5], 64
    %v516 = vld [vmem:[%s515] sm:$0xff]
    %v517 = vld [vmem:[%s515 + $0x8] sm:$0xff]
    %v518 = vld [vmem:[%s515 + $0x10] sm:$0xff]
    %v519 = vld [vmem:[%s515 + $0x18] sm:$0xff]
    %v520 = vld [vmem:[%s515 + $0x20] sm:$0xff]
    %v521 = vld [vmem:[%s515 + $0x28] sm:$0xff]
    %v522 = vld [vmem:[%s515 + $0x30] sm:$0xff]
    %v523 = vld [vmem:[%s515 + $0x38] sm:$0xff]
    %v524 = vpack.c.bf16 %v517, %v516
    %v525 = vpack.c.bf16 %v519, %v518
    %v526 = vpack.c.bf16 %v521, %v520
    %v527 = vpack.c.bf16 %v523, %v522
    %s528 = scalar_lea.vmem %s3, 24
    %v529 = vld [vmem:[%s528] sm:$0xf]
    %v530 = vld [vmem:[%s528 + $0x4] sm:$0xf]
    %v531 = vld [vmem:[%s528 + $0x8] sm:$0xf]
    %v532 = vld [vmem:[%s528 + $0xc] sm:$0xf]
    %v533 = vld [vmem:[%s528 + $0x10] sm:$0xf]
    %v534 = vld [vmem:[%s528 + $0x14] sm:$0xf]
    %v541 = vunpack.c.l.b16 %v529
    %v542 = vunpack.c.l.b16 %v530
    %v543 = vunpack.c.l.b16 %v531
    %v544 = vunpack.c.l.b16 %v532
    %v545 = vunpack.c.l.b16 %v533
    %v546 = vunpack.c.l.b16 %v534
    %v547 = vpack.c.b16 %v542, %v541
    %v548 = vpack.c.b16 %v544, %v543
    %v549 = vpack.c.b16 %v546, %v545
    %v551 = vsel %vm126, %v547, 0
    %v554 = vsel %vm126, %v548, 0
    %v557 = vsel %vm126, %v549, 0
    %559 = vmatprep.subr.bf16.mxu0 0
    %560 = vmatpush1.bf16.msra.mxu0 0
    %561 = vmatprep.subr.bf16.mxu0 0
    %562 = vmatpush1.bf16.msra.mxu0 0
    %563 = vmatprep.subr.bf16.mxu0 0
    %564 = vmatpush1.bf16.msra.mxu0 0
    %565 = vmatprep.subr.bf16.mxu0 0
    %566 = vmatpush1.bf16.msra.mxu0 0
    %567 = vmatprep.subr.bf16.mxu0 0
    %568 = vmatpush1.bf16.msra.mxu0 0
    %569 = vmatprep.subr.bf16.mxu0 0
    %570 = vmatpush1.bf16.msra.mxu0 0
    %571 = vmatprep.subr.bf16.mxu0 0
    %572 = vmatpush1.bf16.msra.mxu0 %v501
    %573 = vmatprep.subr.bf16.mxu0 0
    %574 = vmatpush1.bf16.msra.mxu0 %v500
    %575 = vmatprep.subr.bf16.mxu0 0
    %576 = vmatpush2.bf16.msra.mxu0 0
    %577 = vmatprep.subr.bf16.mxu0 0
    %578 = vmatpush2.bf16.msra.mxu0 0
    %579 = vmatprep.subr.bf16.mxu0 0
    %580 = vmatpush2.bf16.msra.mxu0 0
    %581 = vmatprep.subr.bf16.mxu0 0
    %582 = vmatpush2.bf16.msra.mxu0 0
    %583 = vmatprep.subr.bf16.mxu0 0
    %584 = vmatpush2.bf16.msra.mxu0 0
    %585 = vmatprep.subr.bf16.mxu0 0
    %586 = vmatpush2.bf16.msra.mxu0 0
    %587 = vmatprep.subr.bf16.mxu0 0
    %588 = vmatpush2.bf16.msra.mxu0 0
    %589 = vmatprep.subr.bf16.mxu0 0
    %590 = vmatpush2.bf16.msra.mxu0 0
    %591 = vmatprep.mubr.bf16.mxu0 0
    %592 = vmatmul.mubr.bf16.gmra.mxu0 %v551
    %v593 = vpop.f32.mrf.mxu0
    %v594 = vadd.f32 0.0, %v593
    %v595 = vpop.f32.mrf.mxu0
    %v596 = vpop.f32.mrf.mxu0
    %v597 = vadd.f32 0.0, %v596
    %v598 = vpop.f32.mrf.mxu0
    %599 = vmatprep.mubr.bf16.mxu0 0
    %600 = vmatmul.mubr.bf16.gmra.mxu0 %v554
    %v601 = vpop.f32.mrf.mxu0
    %v602 = vadd.f32 0.0, %v601
    %v603 = vpop.f32.mrf.mxu0
    %v604 = vpop.f32.mrf.mxu0
    %v605 = vadd.f32 0.0, %v604
    %v606 = vpop.f32.mrf.mxu0
    %607 = vmatprep.mubr.bf16.mxu0 0
    %608 = vmatmul.mubr.bf16.gmra.mxu0 %v557
    %v609 = vpop.f32.mrf.mxu0
    %v610 = vadd.f32 0.0, %v609
    %v611 = vpop.f32.mrf.mxu0
    %v612 = vpop.f32.mrf.mxu0
    %v613 = vadd.f32 0.0, %v612
    %v614 = vpop.f32.mrf.mxu0
    %615 = vdwg.mxu0
    %v616 = vadd.f32 %v594, %v196
    %v617 = vadd.f32 %v597, %v201
    %v618 = vmax.f32 %v616, 0.0
    %v619 = vmax.f32 %v617, 0.0
    %v620 = vpack.c.bf16 %v619, %v618
    %v622 = vunpack.c.l.b16 %v620
    %v623 = vunpack.c.h.b16 %v620
    %v624 = vpack.c.b16 %v622, %v622
    %v625 = vpack.c.b16 %v623, %v623
    %628 = vst.msk [vmem:[#allocation2] sm:$0xf] %vm215, %v624
    %629 = vst.msk [vmem:[#allocation2 + $0x4] sm:$0xf] %vm215, %v625
    %v630 = vpack.c.bf16 %v605, %v602
    %v632 = vsel %vm229, %v630, 0
    %v635 = vsel %vm229, %v511, 0
    %v638 = vsel %vm229, %v512, 0
    %v641 = vsel %vm229, %v513, 0
    %v644 = vsel %vm229, %v514, 0
    %646 = vmatprep.subr.bf16.mxu0 0
    %647 = vmatpush1.bf16.xpose.msra.mxu0 0
    %648 = vmatprep.subr.bf16.mxu0 0
    %649 = vmatpush1.bf16.xpose.msra.mxu0 0
    %650 = vmatprep.subr.bf16.mxu0 0
    %651 = vmatpush1.bf16.xpose.msra.mxu0 0
    %652 = vmatprep.subr.bf16.mxu0 0
    %653 = vmatpush1.bf16.xpose.msra.mxu0 0
    %654 = vmatprep.subr.bf16.mxu0 0
    %655 = vmatpush1.bf16.xpose.msra.mxu0 %v644
    %656 = vmatprep.subr.bf16.mxu0 0
    %657 = vmatpush1.bf16.xpose.msra.mxu0 %v641
    %658 = vmatprep.subr.bf16.mxu0 0
    %659 = vmatpush1.bf16.xpose.msra.mxu0 %v638
    %660 = vmatprep.subr.bf16.mxu0 0
    %661 = vmatpush1.bf16.xpose.msra.mxu0 %v635
    %662 = vmatprep.subr.bf16.mxu0 0
    %663 = vmatpush2.bf16.xpose.msra.mxu0 0
    %664 = vmatprep.subr.bf16.mxu0 0
    %665 = vmatpush2.bf16.xpose.msra.mxu0 0
    %666 = vmatprep.subr.bf16.mxu0 0
    %667 = vmatpush2.bf16.xpose.msra.mxu0 0
    %668 = vmatprep.subr.bf16.mxu0 0
    %669 = vmatpush2.bf16.xpose.msra.mxu0 0
    %670 = vmatprep.subr.bf16.mxu0 0
    %671 = vmatpush2.bf16.xpose.msra.mxu0 0
    %672 = vmatprep.subr.bf16.mxu0 0
    %673 = vmatpush2.bf16.xpose.msra.mxu0 0
    %674 = vmatprep.subr.bf16.mxu0 0
    %675 = vmatpush2.bf16.xpose.msra.mxu0 0
    %676 = vmatprep.subr.bf16.mxu0 0
    %677 = vmatpush2.bf16.xpose.msra.mxu0 0
    %678 = vmatprep.mubr.bf16.mxu0 0
    %679 = vmatmul.mubr.bf16.gmra.mxu0 %v632
    %v680 = vpop.f32.mrf.mxu0
    %v681 = vadd.f32 %v222, %v680
    %v682 = vpop.f32.mrf.mxu0
    %v683 = vpop.f32.mrf.mxu0
    %v684 = vadd.f32 %v227, %v683
    %v685 = vpop.f32.mrf.mxu0
    %686 = vdwg.mxu0
    %v687 = vmax.f32 %v681, 0.0
    %v688 = vmax.f32 %v684, 0.0
    %v689 = vpack.c.bf16 %v688, %v687
    %v691 = vunpack.c.l.b16 %v689
    %v692 = vunpack.c.h.b16 %v689
    %v693 = vpack.c.b16 %v691, %v691
    %v694 = vpack.c.b16 %v692, %v692
    %697 = vst.msk [vmem:[#allocation2 + $0x8] sm:$0xf] %vm215, %v693
    %698 = vst.msk [vmem:[#allocation2 + $0xc] sm:$0xf] %vm215, %v694
    %v699 = vpack.c.bf16 %v613, %v610
    %v701 = vsel %vm229, %v699, 0
    %v704 = vsel %vm229, %v524, 0
    %v707 = vsel %vm229, %v525, 0
    %v710 = vsel %vm229, %v526, 0
    %v713 = vsel %vm229, %v527, 0
    %715 = vmatprep.subr.bf16.mxu0 0
    %716 = vmatpush1.bf16.xpose.msra.mxu0 0
    %717 = vmatprep.subr.bf16.mxu0 0
    %718 = vmatpush1.bf16.xpose.msra.mxu0 0
    %719 = vmatprep.subr.bf16.mxu0 0
    %720 = vmatpush1.bf16.xpose.msra.mxu0 0
    %721 = vmatprep.subr.bf16.mxu0 0
    %722 = vmatpush1.bf16.xpose.msra.mxu0 0
    %723 = vmatprep.subr.bf16.mxu0 0
    %724 = vmatpush1.bf16.xpose.msra.mxu0 %v713
    %725 = vmatprep.subr.bf16.mxu0 0
    %726 = vmatpush1.bf16.xpose.msra.mxu0 %v710
    %727 = vmatprep.subr.bf16.mxu0 0
    %728 = vmatpush1.bf16.xpose.msra.mxu0 %v707
    %729 = vmatprep.subr.bf16.mxu0 0
    %730 = vmatpush1.bf16.xpose.msra.mxu0 %v704
    %731 = vmatprep.subr.bf16.mxu0 0
    %732 = vmatpush2.bf16.xpose.msra.mxu0 0
    %733 = vmatprep.subr.bf16.mxu0 0
    %734 = vmatpush2.bf16.xpose.msra.mxu0 0
    %735 = vmatprep.subr.bf16.mxu0 0
    %736 = vmatpush2.bf16.xpose.msra.mxu0 0
    %737 = vmatprep.subr.bf16.mxu0 0
    %738 = vmatpush2.bf16.xpose.msra.mxu0 0
    %739 = vmatprep.subr.bf16.mxu0 0
    %740 = vmatpush2.bf16.xpose.msra.mxu0 0
    %741 = vmatprep.subr.bf16.mxu0 0
    %742 = vmatpush2.bf16.xpose.msra.mxu0 0
    %743 = vmatprep.subr.bf16.mxu0 0
    %744 = vmatpush2.bf16.xpose.msra.mxu0 0
    %745 = vmatprep.subr.bf16.mxu0 0
    %746 = vmatpush2.bf16.xpose.msra.mxu0 0
    %747 = vmatprep.mubr.bf16.mxu0 0
    %748 = vmatmul.mubr.bf16.gmra.mxu0 %v701
    %v749 = vpop.f32.mrf.mxu0
    %v750 = vadd.f32 %v302, %v749
    %v751 = vpop.f32.mrf.mxu0
    %v752 = vpop.f32.mrf.mxu0
    %v753 = vadd.f32 %v307, %v752
    %v754 = vpop.f32.mrf.mxu0
    %755 = vdwg.mxu0
    %v756 = vmax.f32 %v750, 0.0
    %v757 = vmax.f32 %v753, 0.0
    %v758 = vpack.c.bf16 %v757, %v756
    %v760 = vunpack.c.l.b16 %v758
    %v761 = vunpack.c.h.b16 %v758
    %v762 = vpack.c.b16 %v760, %v760
    %v763 = vpack.c.b16 %v761, %v761
    %766 = vst.msk [vmem:[#allocation2 + $0x10] sm:$0xf] %vm215, %v762
    %767 = vst.msk [vmem:[#allocation2 + $0x14] sm:$0xf] %vm215, %v763
    %v768 = vld [vmem:[#allocation2] sm:$0xf]
    %v769 = vld [vmem:[#allocation2 + $0x4] sm:$0xf]
    %v770 = vld [vmem:[#allocation2 + $0x8] sm:$0xf]
    %v771 = vld [vmem:[#allocation2 + $0xc] sm:$0xf]
    %v772 = vld [vmem:[#allocation2 + $0x10] sm:$0xf]
    %v773 = vld [vmem:[#allocation2 + $0x14] sm:$0xf]
    %v780 = vunpack.c.l.b16 %v768
    %v781 = vunpack.c.l.b16 %v769
    %v782 = vunpack.c.l.b16 %v770
    %v783 = vunpack.c.l.b16 %v771
    %v784 = vunpack.c.l.b16 %v772
    %v785 = vunpack.c.l.b16 %v773
    %v786 = vpack.c.b16 %v781, %v780
    %v787 = vpack.c.b16 %v783, %v782
    %v788 = vpack.c.b16 %v785, %v784
    %792 = vmatprep.subr.bf16.mxu0 0
    %793 = vmatpush1.bf16.msra.mxu0 0
    %794 = vmatprep.subr.bf16.mxu0 0
    %795 = vmatpush1.bf16.msra.mxu0 0
    %796 = vmatprep.subr.bf16.mxu0 0
    %797 = vmatpush1.bf16.msra.mxu0 0
    %798 = vmatprep.subr.bf16.mxu0 0
    %799 = vmatpush1.bf16.msra.mxu0 0
    %800 = vmatprep.subr.bf16.mxu0 0
    %801 = vmatpush1.bf16.msra.mxu0 0
    %802 = vmatprep.subr.bf16.mxu0 0
    %803 = vmatpush1.bf16.msra.mxu0 %v788
    %804 = vmatprep.subr.bf16.mxu0 0
    %805 = vmatpush1.bf16.msra.mxu0 %v787
    %806 = vmatprep.subr.bf16.mxu0 0
    %807 = vmatpush1.bf16.msra.mxu0 %v786
    %808 = vmatprep.subr.bf16.mxu0 0
    %809 = vmatpush2.bf16.msra.mxu0 0
    %810 = vmatprep.subr.bf16.mxu0 0
    %811 = vmatpush2.bf16.msra.mxu0 0
    %812 = vmatprep.subr.bf16.mxu0 0
    %813 = vmatpush2.bf16.msra.mxu0 0
    %814 = vmatprep.subr.bf16.mxu0 0
    %815 = vmatpush2.bf16.msra.mxu0 0
    %816 = vmatprep.subr.bf16.mxu0 0
    %817 = vmatpush2.bf16.msra.mxu0 0
    %818 = vmatprep.subr.bf16.mxu0 0
    %819 = vmatpush2.bf16.msra.mxu0 0
    %820 = vmatprep.subr.bf16.mxu0 0
    %821 = vmatpush2.bf16.msra.mxu0 0
    %822 = vmatprep.subr.bf16.mxu0 0
    %823 = vmatpush2.bf16.msra.mxu0 0
    %824 = vmatprep.mubr.bf16.mxu0 0
    %825 = vmatmul.mubr.bf16.gmra.mxu0 %v429
    %v826 = vpop.f32.mrf.mxu0
    %v827 = vadd.f32 %v385, %v826
    %v828 = vpop.f32.mrf.mxu0
    %v829 = vpop.f32.mrf.mxu0
    %v830 = vadd.f32 %v389, %v829
    %v831 = vpop.f32.mrf.mxu0
    %832 = vmatprep.mubr.bf16.mxu0 0
    %833 = vmatmul.mubr.bf16.gmra.mxu0 %v432
    %v834 = vpop.f32.mrf.mxu0
    %v835 = vadd.f32 %v393, %v834
    %v836 = vpop.f32.mrf.mxu0
    %v837 = vpop.f32.mrf.mxu0
    %v838 = vadd.f32 %v397, %v837
    %v839 = vpop.f32.mrf.mxu0
    %840 = vdwg.mxu0
    %v841 = vadd.f32 %v827, %v496
    %v842 = vadd.f32 %v830, %v497
    %v843 = vadd.f32 %v835, %v498
    %v844 = vadd.f32 %v838, %v499
    %v845 = vmax.f32 %v841, 0.0
    %v846 = vmax.f32 %v842, 0.0
    %v847 = vmax.f32 %v843, 0.0
    %v848 = vmax.f32 %v844, 0.0
    %853 = vrot.lane.b32.xlu0 %v845, 64
    %v854 = vpop.permute.xlu0 %853
    %855 = vrot.lane.b32.xlu0 %v846, 64
    %v856 = vpop.permute.xlu0 %855
    %857 = vrot.lane.b32.xlu0 %v847, 64
    %v858 = vpop.permute.xlu0 %857
    %859 = vrot.lane.b32.xlu0 %v848, 64
    %v860 = vpop.permute.xlu0 %859
    %vm865 = vcmask 1048064
    %866 = vst.msk [vmem:[%s6] sm:$0xff] %vm865, %v854
    %867 = vst.msk [vmem:[%s6 + $0x8] sm:$0xff] %vm865, %v856
    %868 = vst.msk [vmem:[%s6 + $0x10] sm:$0xff] %vm865, %v858
    %869 = vst.msk [vmem:[%s6 + $0x18] sm:$0xff] %vm865, %v860
    // Predicated region
    $region38: #{graph_convolution_layer.1} parent=1 // pred_check
      _
    $region39: #{graph_convolution_layer.1} parent=1 // pred_check_branch
      %871 = sbr.rel (0) target = $region41
    $region40: #{graph_convolution_layer.1} parent=1 // pred_region
      _
    $region41: #{graph_convolution_layer.1} parent=1 // pred_fallthru
      _
    // Predicated region
    $region42: #{graph_convolution_layer.1} parent=1 // pred_check
      _
    $region43: #{graph_convolution_layer.1} parent=1 // pred_check_branch
      %873 = sbr.rel (0) target = $region45
    $region44: #{graph_convolution_layer.1} parent=1 // pred_region
      _
    $region45: #{graph_convolution_layer.1} parent=1 // pred_fallthru
      _
    %874 = vsyncpa [#allocation4], 1
    %875 = vsyncpa [#allocation6], 1

</llo_original>
